<compile_context>
chip_gen: v6e
topology: v6e:2x2x1
jax: 0.10.0
libtpu: 0.0.40
codegen_flags: <defaults>
</compile_context>

<pallas_src>
import functools

import jax
import jax.numpy as jnp
from jax.experimental import pallas as pl
from jax.experimental.pallas import tpu as pltpu


# ---------------------------------------------------------------------------
# Generation-aware budgets.
# ---------------------------------------------------------------------------
def _tpu_budgets():
    """Returns (block_cap_bytes, vmem_limit_bytes, min_grid_steps)."""
    kind = ""
    try:
        kind = jax.devices()[0].device_kind.lower()
    except Exception:
        pass
    if any(tag in kind for tag in ("v5", "v6")):
        # v5e / v5p / v6e: 128 MiB physical VMEM -> large streaming blocks.
        return 16 << 20, 80 << 20, 2
    # v7x (64 MiB VMEM per core, 2 TensorCores) or unknown: stay conservative
    # and keep >= 4 grid steps so dimension_semantics=("parallel",) can shard.
    return 5 << 20, 28 << 20, 4


# ---------------------------------------------------------------------------
# Kernels.
# ---------------------------------------------------------------------------
def _fused_kernel(x_ref, w1t_ref, w2t_ref, o_ref, *, inv_hw):
    """Single-slab path: pool + bottleneck MLP + scale on one (bblk,C,HW) block."""
    x = x_ref[...]                                           # native dtype
    s = jnp.sum(x, axis=-1, dtype=jnp.float32)               # (bblk, C) f32 accum
    mx = jnp.max(x, axis=-1).astype(jnp.float32)             # (bblk, C)
    avg = s * inv_hw

    bblk = avg.shape[0]
    p = jnp.concatenate([avg, mx], axis=0)                   # (2*bblk, C)
    h = jnp.maximum(
        jnp.dot(p, w1t_ref[...].astype(jnp.float32),
                preferred_element_type=jnp.float32), 0.0)    # (2*bblk, Cr)
    y = jnp.dot(h, w2t_ref[...].astype(jnp.float32),
                preferred_element_type=jnp.float32)          # (2*bblk, C)
    attn = jax.nn.sigmoid(y[:bblk] + y[bblk:])               # (bblk, C) f32

    o_ref[...] = x * attn.astype(x.dtype)[:, :, None]        # stay in input dtype


def _reduce_attn_kernel(x_ref, w1t_ref, w2t_ref, attn_ref, sum_ref, max_ref,
                        *, hw, hwblk, inv_hw):
    """HW-split pass 1: accumulate sum/max over HW chunks, emit attn (B, C)."""
    b = pl.program_id(0)
    h = pl.program_id(1)

    @pl.when((b == 0) & (h == 0))
    def _init():
        sum_ref[...] = jnp.zeros_like(sum_ref)
        max_ref[...] = jnp.full_like(max_ref, -jnp.inf)

    x = x_ref[...]                                           # (1, C, hwblk)
    if hw % hwblk != 0:
        # Only the last HW chunk is ragged; mask the garbage lanes.
        lane = jax.lax.broadcasted_iota(jnp.int32, (1, 1, hwblk), 2)
        valid = lane < (hw - h * hwblk)
        x_sum = jnp.where(valid, x, jnp.zeros_like(x))
        x_max = jnp.where(valid, x, jnp.full_like(x, -jnp.inf))
    else:
        x_sum = x
        x_max = x
    ps = jnp.sum(x_sum, axis=-1, dtype=jnp.float32)          # (1, C)
    pm = jnp.max(x_max, axis=-1).astype(jnp.float32)         # (1, C)

    # Row-select via a static-shape mask (no dynamic sublane stores).
    row = jax.lax.broadcasted_iota(jnp.int32, sum_ref.shape, 0) == b   # (B, C)
    sum_ref[...] = sum_ref[...] + jnp.where(row, ps, 0.0)
    max_ref[...] = jnp.where(row, jnp.maximum(max_ref[...], pm), max_ref[...])

    @pl.when((b == pl.num_programs(0) - 1) & (h == pl.num_programs(1) - 1))
    def _finalize():
        avg = sum_ref[...] * inv_hw                          # (B, C)
        nb = avg.shape[0]
        p = jnp.concatenate([avg, max_ref[...]], axis=0)     # (2B, C)
        hh = jnp.maximum(
            jnp.dot(p, w1t_ref[...].astype(jnp.float32),
                    preferred_element_type=jnp.float32), 0.0)
        y = jnp.dot(hh, w2t_ref[...].astype(jnp.float32),
                    preferred_element_type=jnp.float32)
        attn_ref[...] = jax.nn.sigmoid(y[:nb] + y[nb:])      # (B, C) f32


def _scale_kernel(attn_ref, x_ref, o_ref):
    """HW-split pass 2: out = x * attn[b] for one (1, C, hwblk) chunk."""
    b = pl.program_id(0)
    a = attn_ref[pl.ds(b, 1), :]                             # (1, C) f32
    x = x_ref[...]                                           # (1, C, hwblk)
    o_ref[...] = x * a.astype(x.dtype)[:, :, None]


# ---------------------------------------------------------------------------
# Wrapper.
# ---------------------------------------------------------------------------
def channel_attention(x, w1, w2, *, max_block_bytes=None):
    """ChannelAttention forward.  x: (B,C,H,W); w1: (C//r, C); w2: (C, C//r)."""
    B, C, H, W = x.shape
    HW = H * W
    Cr = w1.shape[0]
    assert w1.shape == (Cr, C) and w2.shape == (C, Cr)

    itemsize = jnp.dtype(x.dtype).itemsize
    block_cap, gen_vmem_limit, min_grid = _tpu_budgets()
    if max_block_bytes is not None:
        block_cap = int(max_block_bytes)

    x_flat = x.reshape(B, C, HW)
    w1t = jnp.asarray(w1).T                                   # (C, Cr)
    w2t = jnp.asarray(w2).T                                   # (Cr, C)
    weight_bytes = (w1t.size + w2t.size) * jnp.dtype(w1.dtype).itemsize
    per_image_bytes = C * HW * itemsize

    def _vmem_limit(block_bytes):
        # double-buffered in + out, weights, pooled stats, margin
        need = 4 * block_bytes + 2 * weight_bytes + 4 * B * C * 4 + (2 << 20)
        return int(min(gen_vmem_limit, max(need, 16 << 20)))

    if per_image_bytes <= block_cap:
        # ---- single fused kernel: whole (bblk, C, HW) slab per grid step ----
        bblk = max(1, min(B, block_cap // per_image_bytes))
        if min_grid > 1:
            bblk = min(bblk, max(1, B // min_grid))           # keep >= min_grid steps
        grid_b = pl.cdiv(B, bblk)                             # edge block handled by Pallas

        out_flat = pl.pallas_call(
            functools.partial(_fused_kernel, inv_hw=1.0 / HW),
            out_shape=jax.ShapeDtypeStruct((B, C, HW), x.dtype),
            grid_spec=pltpu.PrefetchScalarGridSpec(
                num_scalar_prefetch=0,
                grid=(grid_b,),
                in_specs=[
                    pl.BlockSpec((bblk, C, HW), lambda b: (b, 0, 0)),
                    pl.BlockSpec((C, Cr), lambda b: (0, 0)),
                    pl.BlockSpec((Cr, C), lambda b: (0, 0)),
                ],
                out_specs=pl.BlockSpec((bblk, C, HW), lambda b: (b, 0, 0)),
            ),
            compiler_params=pltpu.CompilerParams(
                dimension_semantics=("parallel",),
                vmem_limit_bytes=_vmem_limit(bblk * per_image_bytes)),
            cost_estimate=pl.CostEstimate(
                flops=4 * B * C * HW + 8 * B * C * Cr,
                transcendentals=B * C,
                bytes_accessed=2 * B * C * HW * itemsize + 2 * weight_bytes),
        )(x_flat, w1t, w2t)
        return out_flat.reshape(B, C, H, W)

    # ---- HW-split two-pass path: per-image slab exceeds the block cap ------
    hwblk = max(128, (block_cap // (C * itemsize)) // 128 * 128)  # lane-dense chunks
    hwblk = min(hwblk, HW)
    grid_hw = pl.cdiv(HW, hwblk)
    block_bytes = C * hwblk * itemsize

    attn = pl.pallas_call(
        functools.partial(_reduce_attn_kernel, hw=HW, hwblk=hwblk, inv_hw=1.0 / HW),
        out_shape=jax.ShapeDtypeStruct((B, C), jnp.float32),
        grid_spec=pltpu.PrefetchScalarGridSpec(
            num_scalar_prefetch=0,
            grid=(B, grid_hw),
            in_specs=[
                pl.BlockSpec((1, C, hwblk), lambda b, h: (b, 0, h)),
                pl.BlockSpec((C, Cr), lambda b, h: (0, 0)),
                pl.BlockSpec((Cr, C), lambda b, h: (0, 0)),
            ],
            out_specs=pl.BlockSpec((B, C), lambda b, h: (0, 0)),
            scratch_shapes=[pltpu.VMEM((B, C), jnp.float32),
                            pltpu.VMEM((B, C), jnp.float32)],
        ),
        compiler_params=pltpu.CompilerParams(
            dimension_semantics=("arbitrary", "arbitrary"),
            vmem_limit_bytes=_vmem_limit(block_bytes)),
        cost_estimate=pl.CostEstimate(
            flops=2 * B * C * HW + 8 * B * C * Cr,
            transcendentals=B * C,
            bytes_accessed=B * C * HW * itemsize + 2 * weight_bytes),
    )(x_flat, w1t, w2t)

    out_flat = pl.pallas_call(
        _scale_kernel,
        out_shape=jax.ShapeDtypeStruct((B, C, HW), x.dtype),
        grid_spec=pltpu.PrefetchScalarGridSpec(
            num_scalar_prefetch=0,
            grid=(B, grid_hw),
            in_specs=[
                pl.BlockSpec((B, C), lambda b, h: (0, 0)),
                pl.BlockSpec((1, C, hwblk), lambda b, h: (b, 0, h)),
            ],
            out_specs=pl.BlockSpec((1, C, hwblk), lambda b, h: (b, 0, h)),
        ),
        compiler_params=pltpu.CompilerParams(
            dimension_semantics=("parallel", "parallel"),
            vmem_limit_bytes=_vmem_limit(block_bytes)),
        cost_estimate=pl.CostEstimate(
            flops=B * C * HW,
            transcendentals=0,
            bytes_accessed=2 * B * C * HW * itemsize + B * C * 4),
    )(attn, x_flat)

    return out_flat.reshape(B, C, H, W)


# ---------------------------------------------------------------------------
# Reference and tests.
# ---------------------------------------------------------------------------
def _reference(x, w1, w2):
    avg = x.mean(axis=(2, 3))                                 # (B, C)
    mx = x.max(axis=(2, 3))                                   # (B, C)

    def fc(v):
        h = jnp.maximum(v @ w1.T, 0.0)                        # (B, Cr)
        return h @ w2.T                                       # (B, C)

    attn = jax.nn.sigmoid(fc(avg) + fc(mx))                   # (B, C)
    return x * attn[:, :, None, None]


if __name__ == "__main__":
    key = jax.random.PRNGKey(0)
    k_x, k_w1, k_w2 = jax.random.split(key, 3)

    B, C, H, W = 2, 64, 16, 16
    reduction = 16
    Cr = C // reduction

    x = jax.random.normal(k_x, (B, C, H, W), dtype=jnp.float32)
    # Deterministic synthetic weights (Linear has bias=False in the module).
    w1 = jax.random.normal(k_w1, (Cr, C), dtype=jnp.float32) * 0.1   # Linear(C, C/r).weight
    w2 = jax.random.normal(k_w2, (C, Cr), dtype=jnp.float32) * 0.1   # Linear(C/r, C).weight

    ref = _reference(x, w1, w2)

    # 1) Fused single-slab path (default generation-aware budgets).
    out = jax.block_until_ready(channel_attention(x, w1, w2))
    assert out.shape == (B, C, H, W)
    assert jnp.allclose(out, ref, atol=1e-5, rtol=1e-5), (
        float(jnp.max(jnp.abs(out - ref))))

    # 2) Single-slab path with a cdiv batch edge block (odd B).
    x5 = jax.random.normal(key, (5, C, H, W), dtype=jnp.float32)
    out5 = jax.block_until_ready(channel_attention(x5, w1, w2))
    assert jnp.allclose(out5, _reference(x5, w1, w2), atol=1e-5, rtol=1e-5)

    # 3) HW-split two-pass path (force a tiny block cap), lane-aligned HW.
    out_split = jax.block_until_ready(
        channel_attention(x, w1, w2, max_block_bytes=32 * 1024))
    assert jnp.allclose(out_split, ref, atol=1e-5, rtol=1e-5)

    # 4) HW-split path with ragged spatial size (masked last HW chunk).
    x13 = jax.random.normal(key, (2, C, 13, 13), dtype=jnp.float32)
    out13 = jax.block_until_ready(
        channel_attention(x13, w1, w2, max_block_bytes=32 * 1024))
    assert jnp.allclose(out13, _reference(x13, w1, w2), atol=1e-5, rtol=1e-5)

    print("KERNEL_OK")
</pallas_src>

<mosaic_0001>
module attributes {stable_mosaic.version = 11 : i64} {
  func.func @_fused_kernel(%arg0: i32, %arg1: memref<1x64x256xf32, #tpu.memory_space<vmem>>, %arg2: memref<64x4xf32, #tpu.memory_space<vmem>>, %arg3: memref<4x64xf32, #tpu.memory_space<vmem>>, %arg4: memref<1x64x256xf32, #tpu.memory_space<vmem>>) attributes {dimension_semantics = [#tpu.dimension_semantics<parallel>], iteration_bounds = array<i64: 2>, scalar_prefetch = 0 : i64, scratch_operands = 0 : i64, tpu.core_type = #tpu.core_type<tc>, window_params = [{transform_indices = @transform_0, window_bounds = array<i64: 1, 64, 256>}, {pipeline_mode = #tpu.pipeline_mode<synchronous>, transform_indices = @transform_1, window_bounds = array<i64: 64, 4>}, {pipeline_mode = #tpu.pipeline_mode<synchronous>, transform_indices = @transform_2, window_bounds = array<i64: 4, 64>}, {transform_indices = @transform_3, window_bounds = array<i64: 1, 64, 256>}]} {
    %c0 = arith.constant 0 : index
    %c0_0 = arith.constant 0 : index
    %c0_1 = arith.constant 0 : index
    %0 = vector.load %arg1[%c0, %c0_0, %c0_1] : memref<1x64x256xf32, #tpu.memory_space<vmem>>, vector<1x64x256xf32>
    %cst = arith.constant dense<0.000000e+00> : vector<1x64xf32>
    %1 = vector.multi_reduction <add>, %0, %cst [2] : vector<1x64x256xf32> to vector<1x64xf32>
    %cst_2 = arith.constant dense<0xFF800000> : vector<1x64xf32>
    %2 = vector.multi_reduction <maximumf>, %0, %cst_2 [2] : vector<1x64x256xf32> to vector<1x64xf32>
    %cst_3 = arith.constant 3.906250e-03 : f32
    %3 = vector.broadcast %cst_3 : f32 to vector<1x64xf32>
    %4 = arith.mulf %1, %3 : vector<1x64xf32>
    %5 = tpu.concatenate %4, %2 in 0 : vector<1x64xf32>, vector<1x64xf32> -> vector<2x64xf32>
    %c0_4 = arith.constant 0 : index
    %c0_5 = arith.constant 0 : index
    %6 = vector.load %arg2[%c0_4, %c0_5] : memref<64x4xf32, #tpu.memory_space<vmem>>, vector<64x4xf32>
    %cst_6 = arith.constant dense<0.000000e+00> : vector<2x4xf32>
    %7 = tpu.matmul %5, %6, %cst_6 {dimension_numbers = #tpu.dot_dimension_numbers<[1], [0], [0], [1], [0, 0, 1, 1], [], []>} : vector<2x64xf32>, vector<64x4xf32>, vector<2x4xf32> -> vector<2x4xf32>
    %cst_7 = arith.constant 0.000000e+00 : f32
    %8 = vector.broadcast %cst_7 : f32 to vector<2x4xf32>
    %9 = arith.maximumf %7, %8 : vector<2x4xf32>
    %c0_8 = arith.constant 0 : index
    %c0_9 = arith.constant 0 : index
    %10 = vector.load %arg3[%c0_8, %c0_9] : memref<4x64xf32, #tpu.memory_space<vmem>>, vector<4x64xf32>
    %cst_10 = arith.constant dense<0.000000e+00> : vector<2x64xf32>
    %11 = tpu.matmul %9, %10, %cst_10 {dimension_numbers = #tpu.dot_dimension_numbers<[1], [0], [0], [1], [0, 0, 1, 1], [], []>} : vector<2x4xf32>, vector<4x64xf32>, vector<2x64xf32> -> vector<2x64xf32>
    %12 = vector.extract_strided_slice %11 {offsets = [0, 0], sizes = [1, 64], strides = [1, 1]} : vector<2x64xf32> to vector<1x64xf32>
    %13 = vector.extract_strided_slice %11 {offsets = [1, 0], sizes = [1, 64], strides = [1, 1]} : vector<2x64xf32> to vector<1x64xf32>
    %14 = arith.addf %12, %13 : vector<1x64xf32>
    %15 = arith.negf %14 : vector<1x64xf32>
    %16 = math.exp %15 : vector<1x64xf32>
    %cst_11 = arith.constant 1.000000e+00 : f32
    %17 = vector.broadcast %cst_11 : f32 to vector<1x64xf32>
    %18 = arith.addf %17, %16 : vector<1x64xf32>
    %19 = arith.divf %17, %18 : vector<1x64xf32>
    %20 = vector.shape_cast %19 : vector<1x64xf32> to vector<1x64x1xf32>
    %21 = vector.broadcast %20 : vector<1x64x1xf32> to vector<1x64x256xf32>
    %22 = arith.mulf %0, %21 : vector<1x64x256xf32>
    %c0_12 = arith.constant 0 : index
    %c0_13 = arith.constant 0 : index
    %c0_14 = arith.constant 0 : index
    %23 = vector.load %arg4[%c0_12, %c0_13, %c0_14] : memref<1x64x256xf32, #tpu.memory_space<vmem>>, vector<1x64x256xf32>
    tpu.vector_store %arg4[%c0_12, %c0_13, %c0_14], %22 {strides = array<i32>} : memref<1x64x256xf32, #tpu.memory_space<vmem>>, vector<1x64x256xf32>,
    return
  }
  func.func @transform_0(%arg0: i32) -> (i32, i32, i32) {
    %c0_i32 = arith.constant 0 : i32
    %c0_i32_0 = arith.constant 0 : i32
    %c0_i32_1 = arith.constant 0 : i32
    return %arg0, %c0_i32, %c0_i32_0 : i32, i32, i32
  }
  func.func @transform_1(%arg0: i32) -> (i32, i32) {
    %c0_i32 = arith.constant 0 : i32
    %c0_i32_0 = arith.constant 0 : i32
    %c0_i32_1 = arith.constant 0 : i32
    return %c0_i32, %c0_i32_0 : i32, i32
  }
  func.func @transform_2(%arg0: i32) -> (i32, i32) {
    %c0_i32 = arith.constant 0 : i32
    %c0_i32_0 = arith.constant 0 : i32
    %c0_i32_1 = arith.constant 0 : i32
    return %c0_i32, %c0_i32_0 : i32, i32
  }
  func.func @transform_3(%arg0: i32) -> (i32, i32, i32) {
    %c0_i32 = arith.constant 0 : i32
    %c0_i32_0 = arith.constant 0 : i32
    %c0_i32_1 = arith.constant 0 : i32
    return %arg0, %c0_i32, %c0_i32_0 : i32, i32, i32
  }
}

</mosaic_0001>

<llo_original>
// kernel: tpu_custom_call.1
$region0: #{tpu_custom_call.1}
  #allocation0 [shape = 'u32[]', space=smem, size = 0x4, offset = 0x4, fixed_abs, tag = 'smem constant byte address 0x4 - core index']
  #allocation1 [shape = 'u32[144,128]{1,0:T(1,128)}', space=vmem, size = 0x12000, scoped, tag = 'internal scratch']
  %s0 = inlined_call_operand.hbm [shape: f32[2,64,256], index: 0, kind: input, shape index: {}]
  %s1 = inlined_call_operand.vmem [shape: f32[64,4], index: 1, kind: input, shape index: {}]
  %s2 = inlined_call_operand.vmem [shape: f32[4,64], index: 2, kind: input, shape index: {}]
  %s3 = inlined_call_operand.hbm [shape: f32[2,64,256], index: 3, kind: output, shape index: {}]
  %s4 = sld [smem:[#allocation0]]
  $region49: #{tpu_custom_call.1} parent=0
    _
  %s6 = ssub.s32 1, %s4
  %s7 = scalar_select 0, %s6, %s4
  $region1: #{tpu_custom_call.1} parent=0
    #allocation2 [shape = 'u8[131072]{0}', space=vmem, size = 0x20000, scoped, tag = 'input window, operand 0']
    #allocation3 [shape = 's32[2]{0}', space=sflag, size = 0x8, scoped, tag = 'scoped memory for tpu_custom_call.1']
    #allocation4 [shape = 's32[2]{0}', space=sflag, size = 0x8, scoped, tag = 'scoped memory for tpu_custom_call.1']
    #allocation5 [shape = 'u8[131072]{0}', space=vmem, size = 0x20000, scoped, tag = 'output window, operand 0']
    %8 = vsyncpa [#allocation3], 0
    %s9 = scalar_lea.sflag [#allocation3], 1
    %10 = vsyncpa %s9, 0
    %11 = vsyncpa [#allocation4], 0
    %s12 = scalar_lea.sflag [#allocation4], 1
    %13 = vsyncpa %s12, 0
    loop: start=0, step=1, limit=4
    $region2: #{tpu_custom_call.1} parent=1 // loop_pre_header
      _
    $region3: #{tpu_custom_call.1} parent=1 // loop_header
      %s15 = sphi 0, %s19
      %p16 = scmp.ge.s32.totalorder %s15, 4
      %s25 = sphi 0, %s27
      %s28 = sphi 0, %s25
      %s29 = sphi 0, %s28
      %s45 = sphi 0, %s29
      %s49 = sphi 0, %s49
      %s51 = sphi 0, %s49
      %s52 = sphi 0, %s51
      %s66 = sphi 0, %s52
      %s70 = sphi 0, %s70
      %s72 = sphi 0, %s70
      %s73 = sphi 0, %s72
      %s87 = sphi 0, %s73
      %s93 = sphi 0, %s95
      %s96 = sphi 0, %s93
      %s97 = sphi 0, %s96
      %s113 = sphi 0, %s97
    $region4: #{tpu_custom_call.1} parent=1 // loop_header_branch
      %18 = sbr.rel (%p16) target = $region8
    $region5: #{tpu_custom_call.1} parent=1 // loop_body
      %s20 = ssub.s32 %s15, 1
      %s21 = ssub.s32 %s15, 2
      %s22 = sadd.s32 %s15, 1
      %s23 = ssub.s32 %s15, %s22
      %p24 = scmp.eq.s32.totalorder %s23, 0
      %s26 = sadd.s32 %s25, 1
      %s27 = scalar_select %p24, %s25, %s26
      %p30 = pneg %p24
      %p31 = scmp.eq.s32.totalorder %s15, 1
      %p32 = por %p30, %p31
      %p33 = scmp.ne.s32.totalorder %s25, %s28
      %p34 = scmp.eq.s32.totalorder %s15, 0
      %p35 = por %p33, %p34
      %p36 = scmp.ne.s32.totalorder %s25, %s28
      %p37 = scmp.eq.s32.totalorder %s20, 1
      %p38 = por %p36, %p37
      %p39 = scmp.ne.s32.totalorder %s28, %s29
      %p40 = scmp.eq.s32.totalorder %s20, 0
      %p41 = por %p39, %p40
      %p42 = scmp.ne.s32.totalorder %s28, %s29
      %p43 = scmp.eq.s32.totalorder %s21, 1
      %p44 = por %p42, %p43
      %p46 = scmp.ne.s32.totalorder %s29, %s45
      %p47 = scmp.eq.s32.totalorder %s21, 0
      %p48 = por %p46, %p47
      %s50 = sadd.s32 %s49, 1
      %p53 = scmp.eq.s32.totalorder %s15, 1
      %p54 = scmp.ne.s32.totalorder %s49, %s51
      %p55 = scmp.eq.s32.totalorder %s15, 0
      %p56 = por %p54, %p55
      %p57 = scmp.ne.s32.totalorder %s49, %s51
      %p58 = scmp.eq.s32.totalorder %s20, 1
      %p59 = por %p57, %p58
      %p60 = scmp.ne.s32.totalorder %s51, %s52
      %p61 = scmp.eq.s32.totalorder %s20, 0
      %p62 = por %p60, %p61
      %p63 = scmp.ne.s32.totalorder %s51, %s52
      %p64 = scmp.eq.s32.totalorder %s21, 1
      %p65 = por %p63, %p64
      %p67 = scmp.ne.s32.totalorder %s52, %s66
      %p68 = scmp.eq.s32.totalorder %s21, 0
      %p69 = por %p67, %p68
      %s71 = sadd.s32 %s70, 1
      %p74 = scmp.eq.s32.totalorder %s15, 1
      %p75 = scmp.ne.s32.totalorder %s70, %s72
      %p76 = scmp.eq.s32.totalorder %s15, 0
      %p77 = por %p75, %p76
      %p78 = scmp.ne.s32.totalorder %s70, %s72
      %p79 = scmp.eq.s32.totalorder %s20, 1
      %p80 = por %p78, %p79
      %p81 = scmp.ne.s32.totalorder %s72, %s73
      %p82 = scmp.eq.s32.totalorder %s20, 0
      %p83 = por %p81, %p82
      %p84 = scmp.ne.s32.totalorder %s72, %s73
      %p85 = scmp.eq.s32.totalorder %s21, 1
      %p86 = por %p84, %p85
      %p88 = scmp.ne.s32.totalorder %s73, %s87
      %p89 = scmp.eq.s32.totalorder %s21, 0
      %p90 = por %p88, %p89
      %s91 = ssub.s32 %s15, %s22
      %p92 = scmp.eq.s32.totalorder %s91, 0
      %s94 = sadd.s32 %s93, 1
      %s95 = scalar_select %p92, %s93, %s94
      %p98 = pneg %p92
      %p99 = scmp.eq.s32.totalorder %s15, 1
      %p100 = por %p98, %p99
      %p101 = scmp.ne.s32.totalorder %s93, %s96
      %p102 = scmp.eq.s32.totalorder %s15, 0
      %p103 = por %p101, %p102
      %p104 = scmp.ne.s32.totalorder %s93, %s96
      %p105 = scmp.eq.s32.totalorder %s20, 1
      %p106 = por %p104, %p105
      %p107 = scmp.ne.s32.totalorder %s96, %s97
      %p108 = scmp.eq.s32.totalorder %s20, 0
      %p109 = por %p107, %p108
      %p110 = scmp.ne.s32.totalorder %s96, %s97
      %p111 = scmp.eq.s32.totalorder %s21, 1
      %p112 = por %p110, %p111
      %p114 = scmp.ne.s32.totalorder %s97, %s113
      %p115 = scmp.eq.s32.totalorder %s21, 0
      %p116 = por %p114, %p115
      %p117 = scmp.le.s32.totalorder 1, %s15
      %p118 = scmp.lt.s32.totalorder %s15, 3
      %p119 = pnand %p117, %p118
      %p120 = pneg %p119
      // Predicated region
      $region9: #{tpu_custom_call.1} parent=5 // pred_check
        _
      $region10: #{tpu_custom_call.1} parent=5 // pred_check_branch
        %122 = sbr.rel (%p119) target = $region12
      $region11: #{tpu_custom_call.1} parent=5 // pred_region
        %s123 = ssub.s32 %s15, 1
        // Predicated region
        $region13: #{tpu_custom_call.1} parent=11 // pred_check
          %p124 = pneg %p62
        $region14: #{tpu_custom_call.1} parent=11 // pred_check_branch
          %126 = sbr.rel (%p124) target = $region16
        $region15: #{tpu_custom_call.1} parent=11 // pred_region
          _
        $region16: #{tpu_custom_call.1} parent=11 // pred_fallthru
          _
        // Predicated region
        $region17: #{tpu_custom_call.1} parent=11 // pred_check
          %p127 = pneg %p83
        $region18: #{tpu_custom_call.1} parent=11 // pred_check_branch
          %129 = sbr.rel (%p127) target = $region20
        $region19: #{tpu_custom_call.1} parent=11 // pred_region
          _
        $region20: #{tpu_custom_call.1} parent=11 // pred_fallthru
          _
      $region12: #{tpu_custom_call.1} parent=5 // pred_fallthru
        _
      %p130 = scmp.lt.s32.totalorder %s15, 2
      // Predicated region
      $region21: #{tpu_custom_call.1} parent=5 // pred_check
        %p131 = pneg %p130
      $region22: #{tpu_custom_call.1} parent=5 // pred_check_branch
        %133 = sbr.rel (%p131) target = $region24
      $region23: #{tpu_custom_call.1} parent=5 // pred_region
        // Predicated region
        $region25: #{tpu_custom_call.1} parent=23 // pred_check
          %p134 = pneg %p35
        $region26: #{tpu_custom_call.1} parent=23 // pred_check_branch
          %136 = sbr.rel (%p134) target = $region28
        $region27: #{tpu_custom_call.1} parent=23 // pred_region
          %s137 = sand.u32 %s25, 1
          %s138 = scalar_lea.sflag [#allocation3], %s137
          %s139 = sand.u32 %s25, 1
          %s140 = smul.addr %s139, 128
          %s141 = scalar_lea.vmem [#allocation2], %s140
          %s143 = ssub.s32 2048, 2048
          %144 = vsyncadd %s138, %s143
          %s145 = smul.addr %s15, 16
          %s146 = smul.addr %s145, 128
          %s147 = scalar_lea.hbm %s0, %s146
          %s148 = sshll.u32 %s141, 4
          %s149 = int_to_ptr.vmem [resolvable:$true] %s148
          %154 = dma.hbm_to_vmem [thread:$0]  %s147, 2048, %s149, %s138, 256, 256, 16
        $region28: #{tpu_custom_call.1} parent=23 // pred_fallthru
          _
      $region24: #{tpu_custom_call.1} parent=5 // pred_fallthru
        _
      %p155 = scmp.le.s32.totalorder 1, %s15
      %p156 = scmp.lt.s32.totalorder %s15, 3
      %p157 = pnand %p155, %p156
      %p158 = pneg %p157
      // Predicated region
      $region29: #{tpu_custom_call.1} parent=5 // pred_check
        _
      $region30: #{tpu_custom_call.1} parent=5 // pred_check_branch
        %160 = sbr.rel (%p157) target = $region32
      $region31: #{tpu_custom_call.1} parent=5 // pred_region
        %s161 = ssub.s32 %s15, 1
        %s162 = sand.u32 %s28, 1
        %s163 = scalar_lea.sflag [#allocation3], %s162
        %s164 = sand.u32 %s28, 1
        %s165 = smul.addr %s164, 128
        %s166 = scalar_lea.vmem [#allocation2], %s165
        // Predicated region
        $region33: #{tpu_custom_call.1} parent=31 // pred_check
          %p167 = pneg %p41
        $region34: #{tpu_custom_call.1} parent=31 // pred_check_branch
          %169 = sbr.rel (%p167) target = $region36
        $region35: #{tpu_custom_call.1} parent=31 // pred_region
          %170 = dma.done %s163, 2048
        $region36: #{tpu_custom_call.1} parent=31 // pred_fallthru
          _
        %s171 = sand.u32 %s28, 1
        %s172 = scalar_lea.sflag [#allocation3], %s171
        %s173 = sand.u32 %s28, 1
        %s174 = smul.addr %s173, 128
        %s175 = scalar_lea.vmem [#allocation2], %s174
        %p176 = pneg %p41
        %p177 = pneg %p38
        %p178 = pneg %p62
        %p179 = pneg %p59
        %p180 = pneg %p83
        %p181 = pneg %p80
        %p182 = pneg %p109
        %p183 = pneg %p106
        %s184 = sand.u32 %s96, 1
        %s185 = scalar_lea.sflag [#allocation4], %s184
        %s186 = sand.u32 %s96, 1
        %s187 = smul.addr %s186, 128
        %s188 = scalar_lea.vmem [#allocation5], %s187
        %v189 = vld [vmem:[%s166] sm:$0xff]
        %v190 = vld [vmem:[%s166 + $0x8] sm:$0xff]
        %v191 = vld [vmem:[%s166 + $0x10] sm:$0xff]
        %v192 = vld [vmem:[%s166 + $0x18] sm:$0xff]
        %v193 = vld [vmem:[%s166 + $0x20] sm:$0xff]
        %v194 = vld [vmem:[%s166 + $0x28] sm:$0xff]
        %v195 = vld [vmem:[%s166 + $0x30] sm:$0xff]
        %v196 = vld [vmem:[%s166 + $0x38] sm:$0xff]
        %v197 = vld [vmem:[%s166 + $0x40] sm:$0xff]
        %v198 = vld [vmem:[%s166 + $0x48] sm:$0xff]
        %v199 = vld [vmem:[%s166 + $0x50] sm:$0xff]
        %v200 = vld [vmem:[%s166 + $0x58] sm:$0xff]
        %v201 = vld [vmem:[%s166 + $0x60] sm:$0xff]
        %v202 = vld [vmem:[%s166 + $0x68] sm:$0xff]
        %v203 = vld [vmem:[%s166 + $0x70] sm:$0xff]
        %v204 = vld [vmem:[%s166 + $0x78] sm:$0xff]
        %v205 = vadd.f32 %v189, %v190
        %206 = vadd.xlane.f32.xlu0 %v205
        %v207 = vpop.xlane.xlu0 %206
        %v208 = vadd.f32 %v191, %v192
        %209 = vadd.xlane.f32.xlu0 %v208
        %v210 = vpop.xlane.xlu0 %209
        %v211 = vadd.f32 %v193, %v194
        %212 = vadd.xlane.f32.xlu0 %v211
        %v213 = vpop.xlane.xlu0 %212
        %v214 = vadd.f32 %v195, %v196
        %215 = vadd.xlane.f32.xlu0 %v214
        %v216 = vpop.xlane.xlu0 %215
        %v217 = vadd.f32 %v197, %v198
        %218 = vadd.xlane.f32.xlu0 %v217
        %v219 = vpop.xlane.xlu0 %218
        %v220 = vadd.f32 %v199, %v200
        %221 = vadd.xlane.f32.xlu0 %v220
        %v222 = vpop.xlane.xlu0 %221
        %v223 = vadd.f32 %v201, %v202
        %224 = vadd.xlane.f32.xlu0 %v223
        %v225 = vpop.xlane.xlu0 %224
        %v226 = vadd.f32 %v203, %v204
        %227 = vadd.xlane.f32.xlu0 %v226
        %v228 = vpop.xlane.xlu0 %227
        %v229 = vmax.f32 %v189, %v190
        %230 = vmax.xlane.f32.xlu0 %v229
        %v231 = vpop.xlane.xlu0 %230
        %v232 = vmax.f32 %v191, %v192
        %233 = vmax.xlane.f32.xlu0 %v232
        %v234 = vpop.xlane.xlu0 %233
        %v235 = vmax.f32 %v193, %v194
        %236 = vmax.xlane.f32.xlu0 %v235
        %v237 = vpop.xlane.xlu0 %236
        %v238 = vmax.f32 %v195, %v196
        %239 = vmax.xlane.f32.xlu0 %v238
        %v240 = vpop.xlane.xlu0 %239
        %v241 = vmax.f32 %v197, %v198
        %242 = vmax.xlane.f32.xlu0 %v241
        %v243 = vpop.xlane.xlu0 %242
        %v244 = vmax.f32 %v199, %v200
        %245 = vmax.xlane.f32.xlu0 %v244
        %v246 = vpop.xlane.xlu0 %245
        %v247 = vmax.f32 %v201, %v202
        %248 = vmax.xlane.f32.xlu0 %v247
        %v249 = vpop.xlane.xlu0 %248
        %v250 = vmax.f32 %v203, %v204
        %251 = vmax.xlane.f32.xlu0 %v250
        %v252 = vpop.xlane.xlu0 %251
        %v253 = vmul.f32 %v207, 0.00390625
        %v254 = vmul.f32 %v210, 0.00390625
        %v255 = vmul.f32 %v213, 0.00390625
        %v256 = vmul.f32 %v216, 0.00390625
        %v257 = vmul.f32 %v219, 0.00390625
        %v258 = vmul.f32 %v222, 0.00390625
        %v259 = vmul.f32 %v225, 0.00390625
        %v260 = vmul.f32 %v228, 0.00390625
        %v269 = vlaneseq
        %v270 = vand.u32 %v269, 127
        %v271 = vlaneseq
        %v272 = vshrl.u32 %v271, 7
        %v273 = vsub.s32 %v270, %v272
        %v274 = vrot.slane %v253, %v273
        %v275 = vadd.s32 %v270, 4294967288
        %v276 = vlaneseq
        %v277 = vshrl.u32 %v276, 7
        %v278 = vsub.s32 %v275, %v277
        %v279 = vrot.slane %v254, %v278
        %vm280 = vcmask 130112
        %v281 = vsel %vm280, %v279, %v274
        %v282 = vadd.s32 %v270, 4294967280
        %v283 = vlaneseq
        %v284 = vshrl.u32 %v283, 7
        %v285 = vsub.s32 %v282, %v284
        %v286 = vrot.slane %v255, %v285
        %vm287 = vcmask 195712
        %v288 = vsel %vm287, %v286, %v281
        %v289 = vadd.s32 %v270, 4294967272
        %v290 = vlaneseq
        %v291 = vshrl.u32 %v290, 7
        %v292 = vsub.s32 %v289, %v291
        %v293 = vrot.slane %v256, %v292
        %vm294 = vcmask 261312
        %v295 = vsel %vm294, %v293, %v288
        %v296 = vadd.s32 %v270, 4294967264
        %v297 = vlaneseq
        %v298 = vshrl.u32 %v297, 7
        %v299 = vsub.s32 %v296, %v298
        %v300 = vrot.slane %v257, %v299
        %vm301 = vcmask 326912
        %v302 = vsel %vm301, %v300, %v295
        %v303 = vadd.s32 %v270, 4294967256
        %v304 = vlaneseq
        %v305 = vshrl.u32 %v304, 7
        %v306 = vsub.s32 %v303, %v305
        %v307 = vrot.slane %v258, %v306
        %vm308 = vcmask 392512
        %v309 = vsel %vm308, %v307, %v302
        %v310 = vadd.s32 %v270, 4294967248
        %v311 = vlaneseq
        %v312 = vshrl.u32 %v311, 7
        %v313 = vsub.s32 %v310, %v312
        %v314 = vrot.slane %v259, %v313
        %vm315 = vcmask 458112
        %v316 = vsel %vm315, %v314, %v309
        %v317 = vadd.s32 %v270, 4294967240
        %v318 = vlaneseq
        %v319 = vshrl.u32 %v318, 7
        %v320 = vsub.s32 %v317, %v319
        %v321 = vrot.slane %v260, %v320
        %vm322 = vcmask 523712
        %v323 = vsel %vm322, %v321, %v316
        %v333 = vlaneseq
        %v334 = vshrl.u32 %v333, 7
        %v335 = vsub.s32 %v270, %v334
        %v336 = vrot.slane %v231, %v335
        %v337 = vlaneseq
        %v338 = vshrl.u32 %v337, 7
        %v339 = vsub.s32 %v275, %v338
        %v340 = vrot.slane %v234, %v339
        %v341 = vsel %vm280, %v340, %v336
        %v342 = vlaneseq
        %v343 = vshrl.u32 %v342, 7
        %v344 = vsub.s32 %v282, %v343
        %v345 = vrot.slane %v237, %v344
        %v346 = vsel %vm287, %v345, %v341
        %v347 = vlaneseq
        %v348 = vshrl.u32 %v347, 7
        %v349 = vsub.s32 %v289, %v348
        %v350 = vrot.slane %v240, %v349
        %v351 = vsel %vm294, %v350, %v346
        %v352 = vlaneseq
        %v353 = vshrl.u32 %v352, 7
        %v354 = vsub.s32 %v296, %v353
        %v355 = vrot.slane %v243, %v354
        %v356 = vsel %vm301, %v355, %v351
        %v357 = vlaneseq
        %v358 = vshrl.u32 %v357, 7
        %v359 = vsub.s32 %v303, %v358
        %v360 = vrot.slane %v246, %v359
        %v361 = vsel %vm308, %v360, %v356
        %v362 = vlaneseq
        %v363 = vshrl.u32 %v362, 7
        %v364 = vsub.s32 %v310, %v363
        %v365 = vrot.slane %v249, %v364
        %v366 = vsel %vm315, %v365, %v361
        %v367 = vlaneseq
        %v368 = vshrl.u32 %v367, 7
        %v369 = vsub.s32 %v317, %v368
        %v370 = vrot.slane %v252, %v369
        %v371 = vsel %vm322, %v370, %v366
        %vm373 = vcmask 1040384
        %v374 = vsel %vm373, %v323, %v371
        %v375 = vld [vmem:[%s1] sm:$0xff]
        %v376 = vld [vmem:[%s1 + $0x8] sm:$0xff]
        %v377 = vld [vmem:[%s1 + $0x10] sm:$0xff]
        %v378 = vld [vmem:[%s1 + $0x18] sm:$0xff]
        %v379 = vld [vmem:[%s1 + $0x20] sm:$0xff]
        %v380 = vld [vmem:[%s1 + $0x28] sm:$0xff]
        %v381 = vld [vmem:[%s1 + $0x30] sm:$0xff]
        %v382 = vld [vmem:[%s1 + $0x38] sm:$0xff]
        %vm383 = vcmask 523264
        %v385 = vsel %vm383, %v374, 0
        %387 = vmatprep.subr.mxu0 0.0
        %388 = vmatpush1.msra.mxu0 0.0
        %389 = vmatprep.subr.mxu0 0.0
        %390 = vmatpush1.msra.mxu0 0.0
        %391 = vmatprep.subr.mxu0 0.0
        %392 = vmatpush1.msra.mxu0 0.0
        %393 = vmatprep.subr.mxu0 0.0
        %394 = vmatpush1.msra.mxu0 0.0
        %395 = vmatprep.subr.mxu0 0.0
        %396 = vmatpush1.msra.mxu0 0.0
        %397 = vmatprep.subr.mxu0 0.0
        %398 = vmatpush1.msra.mxu0 0.0
        %399 = vmatprep.subr.mxu0 0.0
        %400 = vmatpush1.msra.mxu0 0.0
        %401 = vmatprep.subr.mxu0 0.0
        %402 = vmatpush1.msra.mxu0 0.0
        %403 = vmatprep.subr.mxu0 0.0
        %404 = vmatpush1.msra.mxu0 %v382
        %405 = vmatprep.subr.mxu0 0.0
        %406 = vmatpush1.msra.mxu0 %v381
        %407 = vmatprep.subr.mxu0 0.0
        %408 = vmatpush1.msra.mxu0 %v380
        %409 = vmatprep.subr.mxu0 0.0
        %410 = vmatpush1.msra.mxu0 %v379
        %411 = vmatprep.subr.mxu0 0.0
        %412 = vmatpush1.msra.mxu0 %v378
        %413 = vmatprep.subr.mxu0 0.0
        %414 = vmatpush1.msra.mxu0 %v377
        %415 = vmatprep.subr.mxu0 0.0
        %416 = vmatpush1.msra.mxu0 %v376
        %417 = vmatprep.subr.mxu0 0.0
        %418 = vmatpush1.msra.mxu0 %v375
        %419 = vmatprep.subr.mxu0 0.0
        %420 = vmatpush2.msra.mxu0 0.0
        %421 = vmatprep.subr.mxu0 0.0
        %422 = vmatpush2.msra.mxu0 0.0
        %423 = vmatprep.subr.mxu0 0.0
        %424 = vmatpush2.msra.mxu0 0.0
        %425 = vmatprep.subr.mxu0 0.0
        %426 = vmatpush2.msra.mxu0 0.0
        %427 = vmatprep.subr.mxu0 0.0
        %428 = vmatpush2.msra.mxu0 0.0
        %429 = vmatprep.subr.mxu0 0.0
        %430 = vmatpush2.msra.mxu0 0.0
        %431 = vmatprep.subr.mxu0 0.0
        %432 = vmatpush2.msra.mxu0 0.0
        %433 = vmatprep.subr.mxu0 0.0
        %434 = vmatpush2.msra.mxu0 0.0
        %435 = vmatprep.subr.mxu0 0.0
        %436 = vmatpush2.msra.mxu0 0.0
        %437 = vmatprep.subr.mxu0 0.0
        %438 = vmatpush2.msra.mxu0 0.0
        %439 = vmatprep.subr.mxu0 0.0
        %440 = vmatpush2.msra.mxu0 0.0
        %441 = vmatprep.subr.mxu0 0.0
        %442 = vmatpush2.msra.mxu0 0.0
        %443 = vmatprep.subr.mxu0 0.0
        %444 = vmatpush2.msra.mxu0 0.0
        %445 = vmatprep.subr.mxu0 0.0
        %446 = vmatpush2.msra.mxu0 0.0
        %447 = vmatprep.subr.mxu0 0.0
        %448 = vmatpush2.msra.mxu0 0.0
        %449 = vmatprep.subr.mxu0 0.0
        %450 = vmatpush2.msra.mxu0 0.0
        %451 = vmatprep.mubr.f32.mxu0 0.0
        %452 = vmatmul.mubr.f32.gmra.mxu0 %v385
        %v453 = vpop.f32.mrf.mxu0
        %v454 = vadd.f32 0.0, %v453
        %v455 = vpop.f32.mrf.mxu0
        %456 = vdwg.mxu0
        %v457 = vmax.f32 %v454, 0.0
        %v458 = vld [vmem:[%s2] sm:$0xf]
        %vm459 = vcmask 31744
        %v461 = vsel %vm459, %v457, 0
        %vm463 = vcmask 1043456
        %v465 = vsel %vm463, %v458, 0
        %467 = vmatprep.subr.mxu0 0.0
        %468 = vmatpush1.msra.mxu0 0.0
        %469 = vmatprep.subr.mxu0 0.0
        %470 = vmatpush1.msra.mxu0 0.0
        %471 = vmatprep.subr.mxu0 0.0
        %472 = vmatpush1.msra.mxu0 0.0
        %473 = vmatprep.subr.mxu0 0.0
        %474 = vmatpush1.msra.mxu0 0.0
        %475 = vmatprep.subr.mxu0 0.0
        %476 = vmatpush1.msra.mxu0 0.0
        %477 = vmatprep.subr.mxu0 0.0
        %478 = vmatpush1.msra.mxu0 0.0
        %479 = vmatprep.subr.mxu0 0.0
        %480 = vmatpush1.msra.mxu0 0.0
        %481 = vmatprep.subr.mxu0 0.0
        %482 = vmatpush1.msra.mxu0 0.0
        %483 = vmatprep.subr.mxu0 0.0
        %484 = vmatpush1.msra.mxu0 0.0
        %485 = vmatprep.subr.mxu0 0.0
        %486 = vmatpush1.msra.mxu0 0.0
        %487 = vmatprep.subr.mxu0 0.0
        %488 = vmatpush1.msra.mxu0 0.0
        %489 = vmatprep.subr.mxu0 0.0
        %490 = vmatpush1.msra.mxu0 0.0
        %491 = vmatprep.subr.mxu0 0.0
        %492 = vmatpush1.msra.mxu0 0.0
        %493 = vmatprep.subr.mxu0 0.0
        %494 = vmatpush1.msra.mxu0 0.0
        %495 = vmatprep.subr.mxu0 0.0
        %496 = vmatpush1.msra.mxu0 0.0
        %497 = vmatprep.subr.mxu0 0.0
        %498 = vmatpush1.msra.mxu0 %v465
        %499 = vmatprep.subr.mxu0 0.0
        %500 = vmatpush2.msra.mxu0 0.0
        %501 = vmatprep.subr.mxu0 0.0
        %502 = vmatpush2.msra.mxu0 0.0
        %503 = vmatprep.subr.mxu0 0.0
        %504 = vmatpush2.msra.mxu0 0.0
        %505 = vmatprep.subr.mxu0 0.0
        %506 = vmatpush2.msra.mxu0 0.0
        %507 = vmatprep.subr.mxu0 0.0
        %508 = vmatpush2.msra.mxu0 0.0
        %509 = vmatprep.subr.mxu0 0.0
        %510 = vmatpush2.msra.mxu0 0.0
        %511 = vmatprep.subr.mxu0 0.0
        %512 = vmatpush2.msra.mxu0 0.0
        %513 = vmatprep.subr.mxu0 0.0
        %514 = vmatpush2.msra.mxu0 0.0
        %515 = vmatprep.subr.mxu0 0.0
        %516 = vmatpush2.msra.mxu0 0.0
        %517 = vmatprep.subr.mxu0 0.0
        %518 = vmatpush2.msra.mxu0 0.0
        %519 = vmatprep.subr.mxu0 0.0
        %520 = vmatpush2.msra.mxu0 0.0
        %521 = vmatprep.subr.mxu0 0.0
        %522 = vmatpush2.msra.mxu0 0.0
        %523 = vmatprep.subr.mxu0 0.0
        %524 = vmatpush2.msra.mxu0 0.0
        %525 = vmatprep.subr.mxu0 0.0
        %526 = vmatpush2.msra.mxu0 0.0
        %527 = vmatprep.subr.mxu0 0.0
        %528 = vmatpush2.msra.mxu0 0.0
        %529 = vmatprep.subr.mxu0 0.0
        %530 = vmatpush2.msra.mxu0 0.0
        %531 = vmatprep.mubr.f32.mxu0 0.0
        %532 = vmatmul.mubr.f32.gmra.mxu0 %v461
        %v533 = vpop.f32.mrf.mxu0
        %v534 = vadd.f32 0.0, %v533
        %v535 = vpop.f32.mrf.mxu0
        %536 = vdwg.mxu0
        %v538 = vrot.slane %v534, 1
        %v540 = vadd.f32 %v534, %v538
        %v541 = vxor.u32 %v540, 2147483648
        %v542 = vmul.f32 %v541, 1.442695
        %v543 = vpow.pop %v542
        %v544 = vadd.f32 %v543, 1.0
        %v545 = vrcp.pop %v544
        %v546 = vmul.f32 1.0, %v545
        %v547 = vlaneseq
        %v548 = vshrl.u32 %v547, 7
        %v549 = vsub.s32 0, %v548
        %v550 = vrot.slane %v546, %v549
        %552 = vbcast.lane.b32.xlu0 %v550, 256
        %v553 = vpop.permute.xlu0 %552
        %s555 = sor.u32 256, 8
        %556 = vbcast.lane.b32.xlu0 %v550, %s555
        %v557 = vpop.permute.xlu0 %556
        %s559 = sor.u32 256, 16
        %560 = vbcast.lane.b32.xlu0 %v550, %s559
        %v561 = vpop.permute.xlu0 %560
        %s563 = sor.u32 256, 24
        %564 = vbcast.lane.b32.xlu0 %v550, %s563
        %v565 = vpop.permute.xlu0 %564
        %s567 = sor.u32 256, 32
        %568 = vbcast.lane.b32.xlu0 %v550, %s567
        %v569 = vpop.permute.xlu0 %568
        %s571 = sor.u32 256, 40
        %572 = vbcast.lane.b32.xlu0 %v550, %s571
        %v573 = vpop.permute.xlu0 %572
        %s575 = sor.u32 256, 48
        %576 = vbcast.lane.b32.xlu0 %v550, %s575
        %v577 = vpop.permute.xlu0 %576
        %s579 = sor.u32 256, 56
        %580 = vbcast.lane.b32.xlu0 %v550, %s579
        %v581 = vpop.permute.xlu0 %580
        %v582 = vmul.f32 %v189, %v553
        %v583 = vmul.f32 %v190, %v553
        %v584 = vmul.f32 %v191, %v557
        %v585 = vmul.f32 %v192, %v557
        %v586 = vmul.f32 %v193, %v561
        %v587 = vmul.f32 %v194, %v561
        %v588 = vmul.f32 %v195, %v565
        %v589 = vmul.f32 %v196, %v565
        %v590 = vmul.f32 %v197, %v569
        %v591 = vmul.f32 %v198, %v569
        %v592 = vmul.f32 %v199, %v573
        %v593 = vmul.f32 %v200, %v573
        %v594 = vmul.f32 %v201, %v577
        %v595 = vmul.f32 %v202, %v577
        %v596 = vmul.f32 %v203, %v581
        %v597 = vmul.f32 %v204, %v581
        %598 = vst [vmem:[%s188] sm:$0xff] %v582
        %599 = vst [vmem:[%s188 + $0x8] sm:$0xff] %v583
        %600 = vst [vmem:[%s188 + $0x10] sm:$0xff] %v584
        %601 = vst [vmem:[%s188 + $0x18] sm:$0xff] %v585
        %602 = vst [vmem:[%s188 + $0x20] sm:$0xff] %v586
        %603 = vst [vmem:[%s188 + $0x28] sm:$0xff] %v587
        %604 = vst [vmem:[%s188 + $0x30] sm:$0xff] %v588
        %605 = vst [vmem:[%s188 + $0x38] sm:$0xff] %v589
        %606 = vst [vmem:[%s188 + $0x40] sm:$0xff] %v590
        %607 = vst [vmem:[%s188 + $0x48] sm:$0xff] %v591
        %608 = vst [vmem:[%s188 + $0x50] sm:$0xff] %v592
        %609 = vst [vmem:[%s188 + $0x58] sm:$0xff] %v593
        %610 = vst [vmem:[%s188 + $0x60] sm:$0xff] %v594
        %611 = vst [vmem:[%s188 + $0x68] sm:$0xff] %v595
        %612 = vst [vmem:[%s188 + $0x70] sm:$0xff] %v596
        %613 = vst [vmem:[%s188 + $0x78] sm:$0xff] %v597
        %s614 = sand.u32 %s96, 1
        %s615 = scalar_lea.sflag [#allocation4], %s614
        %s616 = sand.u32 %s96, 1
        %s617 = smul.addr %s616, 128
        %s618 = scalar_lea.vmem [#allocation5], %s617
        // Predicated region
        $region37: #{tpu_custom_call.1} parent=31 // pred_check
          %p619 = pneg %p106
        $region38: #{tpu_custom_call.1} parent=31 // pred_check_branch
          %621 = sbr.rel (%p619) target = $region40
        $region39: #{tpu_custom_call.1} parent=31 // pred_region
          %s623 = ssub.s32 2048, 2048
          %624 = vsyncadd %s615, %s623
          %s625 = smul.addr %s20, 16
          %s626 = smul.addr %s625, 128
          %s627 = scalar_lea.hbm %s3, %s626
          %s628 = sshll.u32 %s618, 4
          %s629 = int_to_ptr.vmem [resolvable:$true] %s628
          %634 = dma.vmem_to_hbm [thread:$0]  %s629, 2048, %s627, %s615, 256, 256, 16
        $region40: #{tpu_custom_call.1} parent=31 // pred_fallthru
          _
      $region32: #{tpu_custom_call.1} parent=5 // pred_fallthru
        _
      %p635 = scmp.le.s32.totalorder 2, %s15
      // Predicated region
      $region41: #{tpu_custom_call.1} parent=5 // pred_check
        %p636 = pneg %p635
      $region42: #{tpu_custom_call.1} parent=5 // pred_check_branch
        %638 = sbr.rel (%p636) target = $region44
      $region43: #{tpu_custom_call.1} parent=5 // pred_region
        %s639 = ssub.s32 %s15, 2
        // Predicated region
        $region45: #{tpu_custom_call.1} parent=43 // pred_check
          %p640 = pneg %p112
        $region46: #{tpu_custom_call.1} parent=43 // pred_check_branch
          %642 = sbr.rel (%p640) target = $region48
        $region47: #{tpu_custom_call.1} parent=43 // pred_region
          %s643 = sand.u32 %s97, 1
          %s644 = scalar_lea.sflag [#allocation4], %s643
          %s645 = sand.u32 %s97, 1
          %s646 = smul.addr %s645, 128
          %s647 = scalar_lea.vmem [#allocation5], %s646
          %648 = dma.done %s644, 2048
        $region48: #{tpu_custom_call.1} parent=43 // pred_fallthru
          _
      $region44: #{tpu_custom_call.1} parent=5 // pred_fallthru
        _
    $region6: #{tpu_custom_call.1} parent=1 // loop_footer
      %s19 = sadd.s32 1, %s15
    $region7: #{tpu_custom_call.1} parent=1 // loop_footer_branch
      %14 = sbr.rel target = $region3
    $region8: #{tpu_custom_call.1} parent=1 // loop_exit
      _
    %649 = vsyncpa [#allocation3], 1
    %s650 = scalar_lea.sflag [#allocation3], 1
    %651 = vsyncpa %s650, 1
    %652 = vsyncpa [#allocation4], 1
    %s653 = scalar_lea.sflag [#allocation4], 1
    %654 = vsyncpa %s653, 1

</llo_original>
